<compile_context>
chip_gen: v5e
topology: v5e:2x2
jax: 0.10.0
libtpu: 0.0.40
codegen_flags: <defaults>
</compile_context>

<pallas_src>
import functools

import jax
import jax.numpy as jnp
from jax.experimental import pallas as pl
from jax.experimental.pallas import tpu as pltpu

LANES = 128  # TPU lane width


def _round_up(n, m):
    return ((n + m - 1) // m) * m


# ----------------------------------------------------------------------------
# One-time parameter preparation (hoisted out of the per-call path).
# ----------------------------------------------------------------------------
def prepare_params(w1, b1, w2, b2):
    """bf16 MXU operands + lane-pad fc2 to 128 output lanes. Call once at init
    (or after each optimizer step) and reuse the returned arrays every call."""
    H = w1.shape[1]
    D_out = w2.shape[1]
    D_out_p = _round_up(D_out, LANES)
    w1_b = w1.astype(jnp.bfloat16)                                   # (D_in, H)
    b1_r = b1.reshape(1, H).astype(jnp.float32)                      # (1, H)
    w2_p = jnp.pad(w2.astype(jnp.bfloat16),
                   ((0, 0), (0, D_out_p - D_out)))                   # (H, 128)
    b2_p = jnp.pad(b2.reshape(1, D_out).astype(jnp.float32),
                   ((0, 0), (0, D_out_p - D_out)))                   # (1, 128)
    return w1_b, b1_r, w2_p, b2_p


# ----------------------------------------------------------------------------
# Kernels
# ----------------------------------------------------------------------------
def _mlp_q_kernel(x_ref, w1_ref, b1_ref, w2_ref, b2_ref, o_ref):
    # fc1: bf16 x bf16 -> f32 on the MXU; bias + ReLU in f32 on the VPU.
    xb = x_ref[...].astype(jnp.bfloat16)                  # in-kernel cast (free)
    h = jnp.dot(xb, w1_ref[...], preferred_element_type=jnp.float32)
    h = jnp.maximum(h + b1_ref[...], 0.0)                 # (TB, H) + (1, H)
    # fc2: cast hidden back to bf16 for the MXU; bias add in f32.
    out = jnp.dot(h.astype(jnp.bfloat16), w2_ref[...],
                  preferred_element_type=jnp.float32)
    o_ref[...] = (out + b2_ref[...]).astype(o_ref.dtype)  # (TB, 128) lane-dense


def _mlp_argmax_kernel(x_ref, w1_ref, b1_ref, w2_ref, b2_ref, a_ref, *, d_out):
    # Same forward as above, then a fused per-row greedy argmax so only int32
    # actions leave the kernel (cuts the output HBM stream ~128x).
    xb = x_ref[...].astype(jnp.bfloat16)
    h = jnp.maximum(
        jnp.dot(xb, w1_ref[...], preferred_element_type=jnp.float32)
        + b1_ref[...], 0.0)
    q = jnp.dot(h.astype(jnp.bfloat16), w2_ref[...],
                preferred_element_type=jnp.float32) + b2_ref[...]
    lane = jax.lax.broadcasted_iota(jnp.int32, q.shape, 1)
    q = jnp.where(lane < d_out, q, -jnp.inf)              # mask padded Q lanes
    row_max = jnp.max(q, axis=-1, keepdims=True)
    # First index attaining the max (matches argmax tie-breaking) via min-reduce.
    cand = jnp.where(q == row_max, lane, q.shape[-1])
    a_ref[...] = jnp.min(cand, axis=-1, keepdims=True)    # (TB, 1) int32


# ----------------------------------------------------------------------------
# Wrappers
# ----------------------------------------------------------------------------
def _grid_setup(B, block_b):
    eff_block = min(block_b, _round_up(B, LANES))   # single tile for tiny batches
    B_p = _round_up(B, eff_block)
    return eff_block, B_p, B_p // eff_block


def _common_specs(eff_block, D_in, H, D_out_p):
    return [
        pl.BlockSpec((eff_block, D_in), lambda i: (i, 0)),   # x tile
        pl.BlockSpec((D_in, H), lambda i: (0, 0)),           # W1 resident
        pl.BlockSpec((1, H), lambda i: (0, 0)),               # b1 resident
        pl.BlockSpec((H, D_out_p), lambda i: (0, 0)),          # W2 resident
        pl.BlockSpec((1, D_out_p), lambda i: (0, 0)),          # b2 resident
    ]


@functools.partial(jax.jit, static_argnames=("d_out", "block_b"))
def dqn_her_forward(x, w1_b, b1_r, w2_p, b2_p, *, d_out, block_b=512):
    """Q-values: relu(x @ W1 + b1) @ W2 + b2.  Returns (B, d_out) float32."""
    B, D_in = x.shape
    H = w1_b.shape[1]
    D_out_p = w2_p.shape[1]
    eff_block, B_p, n_tiles = _grid_setup(B, block_b)
    x_in = x if B_p == B else jnp.pad(x, ((0, B_p - B), (0, 0)))

    flops = 2 * B_p * (D_in * H + H * D_out_p)
    bytes_accessed = (x_in.size * 4 + w1_b.size * 2 + w2_p.size * 2
                      + b1_r.size * 4 + b2_p.size * 4 + B_p * D_out_p * 4)

    out_p = pl.pallas_call(
        _mlp_q_kernel,
        out_shape=jax.ShapeDtypeStruct((B_p, D_out_p), jnp.float32),
        grid_spec=pl.GridSpec(
            grid=(n_tiles,),
            in_specs=_common_specs(eff_block, D_in, H, D_out_p),
            out_specs=pl.BlockSpec((eff_block, D_out_p), lambda i: (i, 0)),
        ),
        compiler_params=pltpu.CompilerParams(
            dimension_semantics=("parallel",)),  # v7x: shard batch tiles on 2 TCs
        cost_estimate=pl.CostEstimate(
            flops=flops, transcendentals=0, bytes_accessed=bytes_accessed),
    )(x_in, w1_b, b1_r, w2_p, b2_p)

    # Slice the lane/batch-padded slab back to the logical shape (training path
    # keeps f32 Q-values; the act() path uses dqn_her_greedy_action instead,
    # which has no padded output slab to slice).
    return out_p[:B, :d_out]


@functools.partial(jax.jit, static_argnames=("d_out", "block_b"))
def dqn_her_greedy_action(x, w1_b, b1_r, w2_p, b2_p, *, d_out, block_b=512):
    """Fused forward + per-row argmax: returns (B,) int32 greedy actions."""
    B, D_in = x.shape
    H = w1_b.shape[1]
    D_out_p = w2_p.shape[1]
    eff_block, B_p, n_tiles = _grid_setup(B, block_b)
    x_in = x if B_p == B else jnp.pad(x, ((0, B_p - B), (0, 0)))

    flops = 2 * B_p * (D_in * H + H * D_out_p)
    bytes_accessed = (x_in.size * 4 + w1_b.size * 2 + w2_p.size * 2
                      + b1_r.size * 4 + b2_p.size * 4 + B_p * 4)

    actions = pl.pallas_call(
        functools.partial(_mlp_argmax_kernel, d_out=d_out),
        out_shape=jax.ShapeDtypeStruct((B_p, 1), jnp.int32),
        grid_spec=pl.GridSpec(
            grid=(n_tiles,),
            in_specs=_common_specs(eff_block, D_in, H, D_out_p),
            out_specs=pl.BlockSpec((eff_block, 1), lambda i: (i, 0)),
        ),
        compiler_params=pltpu.CompilerParams(
            dimension_semantics=("parallel",)),
        cost_estimate=pl.CostEstimate(
            flops=flops, transcendentals=0, bytes_accessed=bytes_accessed),
    )(x_in, w1_b, b1_r, w2_p, b2_p)

    return actions[:B, 0]


# ----------------------------------------------------------------------------
# Init + reference
# ----------------------------------------------------------------------------
def init_params(key, input_dim, hidden_dim, output_dim):
    """Deterministic synthetic init (uniform, PyTorch-Linear-style bounds)."""
    k1, k2, k3, k4 = jax.random.split(key, 4)
    bound1 = 1.0 / jnp.sqrt(input_dim)
    bound2 = 1.0 / jnp.sqrt(hidden_dim)
    w1 = jax.random.uniform(k1, (input_dim, hidden_dim), jnp.float32, -bound1, bound1)
    b1 = jax.random.uniform(k2, (1, hidden_dim), jnp.float32, -bound1, bound1)
    w2 = jax.random.uniform(k3, (hidden_dim, output_dim), jnp.float32, -bound2, bound2)
    b2 = jax.random.uniform(k4, (1, output_dim), jnp.float32, -bound2, bound2)
    return w1, b1, w2, b2


def _reference(x, w1, b1, w2, b2):
    # Pure-JAX reference using the same bf16-rounded MXU operands (f32 accumulate).
    xb = x.astype(jnp.bfloat16).astype(jnp.float32)
    w1b = w1.astype(jnp.bfloat16).astype(jnp.float32)
    w2b = w2.astype(jnp.bfloat16).astype(jnp.float32)
    h = jnp.maximum(xb @ w1b + b1.reshape(1, -1), 0.0)
    hb = h.astype(jnp.bfloat16).astype(jnp.float32)
    return hb @ w2b + b2.reshape(1, -1)


if __name__ == "__main__":
    # DQN_HER(input_dim=16, output_dim=4): state+goal concat of length 16, 4 actions.
    D_in, H, D_out = 16, 256, 4

    key = jax.random.PRNGKey(0)
    kx1, kx2, kx3, kp = jax.random.split(key, 4)
    w1, b1, w2, b2 = init_params(kp, D_in, H, D_out)
    params = prepare_params(w1, b1, w2, b2)   # hoisted one-time weight prep

    # Batched (training-style) forward — single 256-row tile.
    x_big = jax.random.normal(kx1, (256, D_in), jnp.float32)
    out_big = jax.block_until_ready(dqn_her_forward(x_big, *params, d_out=D_out))
    assert out_big.shape == (256, D_out)
    assert jnp.allclose(out_big, _reference(x_big, w1, b1, w2, b2),
                        atol=2e-3, rtol=2e-3)

    # Multi-tile path: 2 x 512-row tiles, no batch padding -> both v7x TCs.
    x_mid = jax.random.normal(kx3, (1024, D_in), jnp.float32)
    out_mid = jax.block_until_ready(dqn_her_forward(x_mid, *params, d_out=D_out))
    assert out_mid.shape == (1024, D_out)
    assert jnp.allclose(out_mid, _reference(x_mid, w1, b1, w2, b2),
                        atol=2e-3, rtol=2e-3)

    # Tiny act()-style batch (B=2): Q-value forward + fused-argmax action kernel.
    x_small = jax.random.normal(kx2, (2, D_in), jnp.float32)
    out_small = jax.block_until_ready(dqn_her_forward(x_small, *params, d_out=D_out))
    assert out_small.shape == (2, D_out)
    assert jnp.allclose(out_small, _reference(x_small, w1, b1, w2, b2),
                        atol=2e-3, rtol=2e-3)

    actions = jax.block_until_ready(
        dqn_her_greedy_action(x_small, *params, d_out=D_out))
    assert actions.shape == (2,)
    assert bool(jnp.all((actions >= 0) & (actions < D_out)))
    # Selected action must attain the row max of the kernel's own Q-values.
    q_sel = jnp.take_along_axis(out_small, actions[:, None].astype(jnp.int32),
                                axis=1)[:, 0]
    assert bool(jnp.all(q_sel >= jnp.max(out_small, axis=-1) - 1e-3))

    # TODO(synk): act()'s decaying epsilon-greedy exploration (host RNG, step
    # counter) stays outside the kernel; the greedy branch uses the fused
    # argmax kernel above.
    print("KERNEL_OK")
</pallas_src>

<mosaic_0001>
module attributes {stable_mosaic.version = 11 : i64} {
  func.func @_mlp_q_kernel(%arg0: i32, %arg1: memref<256x16xf32, #tpu.memory_space<vmem>>, %arg2: memref<16x256xbf16, #tpu.memory_space<vmem>>, %arg3: memref<1x256xf32, #tpu.memory_space<vmem>>, %arg4: memref<256x128xbf16, #tpu.memory_space<vmem>>, %arg5: memref<1x128xf32, #tpu.memory_space<vmem>>, %arg6: memref<256x128xf32, #tpu.memory_space<vmem>>) attributes {dimension_semantics = [#tpu.dimension_semantics<parallel>], iteration_bounds = array<i64: 1>, scalar_prefetch = 0 : i64, scratch_operands = 0 : i64, tpu.core_type = #tpu.core_type<tc>, window_params = [{transform_indices = @transform_0, window_bounds = array<i64: 256, 16>}, {pipeline_mode = #tpu.pipeline_mode<synchronous>, transform_indices = @transform_1, window_bounds = array<i64: 16, 256>}, {pipeline_mode = #tpu.pipeline_mode<synchronous>, transform_indices = @transform_2, window_bounds = array<i64: 1, 256>}, {pipeline_mode = #tpu.pipeline_mode<synchronous>, transform_indices = @transform_3, window_bounds = array<i64: 256, 128>}, {pipeline_mode = #tpu.pipeline_mode<synchronous>, transform_indices = @transform_4, window_bounds = array<i64: 1, 128>}, {transform_indices = @transform_5, window_bounds = array<i64: 256, 128>}]} {
    %c0 = arith.constant 0 : index
    %c0_0 = arith.constant 0 : index
    %0 = vector.load %arg1[%c0, %c0_0] : memref<256x16xf32, #tpu.memory_space<vmem>>, vector<256x16xf32>
    %1 = arith.truncf %0 : vector<256x16xf32> to vector<256x16xbf16>
    %c0_1 = arith.constant 0 : index
    %c0_2 = arith.constant 0 : index
    %2 = vector.load %arg2[%c0_1, %c0_2] : memref<16x256xbf16, #tpu.memory_space<vmem>>, vector<16x256xbf16>
    %cst = arith.constant dense<0.000000e+00> : vector<256x256xf32>
    %3 = tpu.matmul %1, %2, %cst {dimension_numbers = #tpu.dot_dimension_numbers<[1], [0], [0], [1], [0, 0, 1, 1], [], []>} : vector<256x16xbf16>, vector<16x256xbf16>, vector<256x256xf32> -> vector<256x256xf32>
    %c0_3 = arith.constant 0 : index
    %c0_4 = arith.constant 0 : index
    %4 = vector.load %arg3[%c0_3, %c0_4] : memref<1x256xf32, #tpu.memory_space<vmem>>, vector<1x256xf32>
    %5 = vector.broadcast %4 : vector<1x256xf32> to vector<256x256xf32>
    %6 = arith.addf %3, %5 : vector<256x256xf32>
    %cst_5 = arith.constant 0.000000e+00 : f32
    %7 = vector.broadcast %cst_5 : f32 to vector<256x256xf32>
    %8 = arith.maximumf %6, %7 : vector<256x256xf32>
    %9 = arith.truncf %8 : vector<256x256xf32> to vector<256x256xbf16>
    %c0_6 = arith.constant 0 : index
    %c0_7 = arith.constant 0 : index
    %10 = vector.load %arg4[%c0_6, %c0_7] : memref<256x128xbf16, #tpu.memory_space<vmem>>, vector<256x128xbf16>
    %cst_8 = arith.constant dense<0.000000e+00> : vector<256x128xf32>
    %11 = tpu.matmul %9, %10, %cst_8 {dimension_numbers = #tpu.dot_dimension_numbers<[1], [0], [0], [1], [0, 0, 1, 1], [], []>} : vector<256x256xbf16>, vector<256x128xbf16>, vector<256x128xf32> -> vector<256x128xf32>
    %c0_9 = arith.constant 0 : index
    %c0_10 = arith.constant 0 : index
    %12 = vector.load %arg5[%c0_9, %c0_10] : memref<1x128xf32, #tpu.memory_space<vmem>>, vector<1x128xf32>
    %13 = vector.broadcast %12 : vector<1x128xf32> to vector<256x128xf32>
    %14 = arith.addf %11, %13 : vector<256x128xf32>
    %c0_11 = arith.constant 0 : index
    %c0_12 = arith.constant 0 : index
    %15 = vector.load %arg6[%c0_11, %c0_12] : memref<256x128xf32, #tpu.memory_space<vmem>>, vector<256x128xf32>
    tpu.vector_store %arg6[%c0_11, %c0_12], %14 {strides = array<i32>} : memref<256x128xf32, #tpu.memory_space<vmem>>, vector<256x128xf32>,
    return
  }
  func.func @transform_0(%arg0: i32) -> (i32, i32) {
    %c0_i32 = arith.constant 0 : i32
    %c0_i32_0 = arith.constant 0 : i32
    return %arg0, %c0_i32 : i32, i32
  }
  func.func @transform_1(%arg0: i32) -> (i32, i32) {
    %c0_i32 = arith.constant 0 : i32
    %c0_i32_0 = arith.constant 0 : i32
    %c0_i32_1 = arith.constant 0 : i32
    return %c0_i32, %c0_i32_0 : i32, i32
  }
  func.func @transform_2(%arg0: i32) -> (i32, i32) {
    %c0_i32 = arith.constant 0 : i32
    %c0_i32_0 = arith.constant 0 : i32
    %c0_i32_1 = arith.constant 0 : i32
    return %c0_i32, %c0_i32_0 : i32, i32
  }
  func.func @transform_3(%arg0: i32) -> (i32, i32) {
    %c0_i32 = arith.constant 0 : i32
    %c0_i32_0 = arith.constant 0 : i32
    %c0_i32_1 = arith.constant 0 : i32
    return %c0_i32, %c0_i32_0 : i32, i32
  }
  func.func @transform_4(%arg0: i32) -> (i32, i32) {
    %c0_i32 = arith.constant 0 : i32
    %c0_i32_0 = arith.constant 0 : i32
    %c0_i32_1 = arith.constant 0 : i32
    return %c0_i32, %c0_i32_0 : i32, i32
  }
  func.func @transform_5(%arg0: i32) -> (i32, i32) {
    %c0_i32 = arith.constant 0 : i32
    %c0_i32_0 = arith.constant 0 : i32
    return %arg0, %c0_i32 : i32, i32
  }
}

</mosaic_0001>

<llo_original>
// kernel: dqn_her_forward.1
$region0: #{dqn_her_forward.1}
  #allocation0 [shape = 'u32[]', space=smem, size = 0x4, offset = 0x4, fixed_abs, tag = 'smem constant byte address 0x4 - core index']
  #allocation1 [shape = 'u32[72,128]{1,0:T(1,128)}', space=vmem, size = 0x9000, scoped, tag = 'internal scratch']
  %s0 = inlined_call_operand.vmem [shape: f32[256,16], index: 0, kind: input, shape index: {}]
  %s1 = inlined_call_operand.vmem [shape: bf16[16,256], index: 1, kind: input, shape index: {}]
  %s2 = inlined_call_operand.vmem [shape: f32[1,256], index: 2, kind: input, shape index: {}]
  %s3 = inlined_call_operand.vmem [shape: bf16[256,128], index: 3, kind: input, shape index: {}]
  %s4 = inlined_call_operand.vmem [shape: f32[1,128], index: 4, kind: input, shape index: {}]
  %s5 = inlined_call_operand.vmem [shape: f32[256,128], index: 5, kind: output, shape index: {}]
  %s6 = sld [smem:[#allocation0]]
  $region30: #{dqn_her_forward.1} parent=0
    _
  %s8 = ssub.s32 1, %s6
  %s9 = scalar_select 0, %s8, %s6
  // Predicated region
  $region2: #{dqn_her_forward.1} parent=0 // pred_check
    _
  $region3: #{dqn_her_forward.1} parent=0 // pred_check_branch
    %11 = sbr.rel (0) target = $region5
  $region4: #{dqn_her_forward.1} parent=0 // pred_region
    _
  $region5: #{dqn_her_forward.1} parent=0 // pred_fallthru
    _
  // Predicated region
  $region6: #{dqn_her_forward.1} parent=0 // pred_check
    _
  $region7: #{dqn_her_forward.1} parent=0 // pred_check_branch
    %13 = sbr.rel (0) target = $region9
  $region8: #{dqn_her_forward.1} parent=0 // pred_region
    _
  $region9: #{dqn_her_forward.1} parent=0 // pred_fallthru
    _
  // Predicated region
  $region10: #{dqn_her_forward.1} parent=0 // pred_check
    _
  $region11: #{dqn_her_forward.1} parent=0 // pred_check_branch
    %15 = sbr.rel (0) target = $region13
  $region12: #{dqn_her_forward.1} parent=0 // pred_region
    _
  $region13: #{dqn_her_forward.1} parent=0 // pred_fallthru
    _
  // Predicated region
  $region14: #{dqn_her_forward.1} parent=0 // pred_check
    _
  $region15: #{dqn_her_forward.1} parent=0 // pred_check_branch
    %17 = sbr.rel (0) target = $region17
  $region16: #{dqn_her_forward.1} parent=0 // pred_region
    _
  $region17: #{dqn_her_forward.1} parent=0 // pred_fallthru
    _
  // Predicated region
  $region18: #{dqn_her_forward.1} parent=0 // pred_check
    _
  $region19: #{dqn_her_forward.1} parent=0 // pred_check_branch
    %19 = sbr.rel (0) target = $region21
  $region20: #{dqn_her_forward.1} parent=0 // pred_region
    _
  $region21: #{dqn_her_forward.1} parent=0 // pred_fallthru
    _
  %v21 = vld [vmem:[%s0] sm:$0xff]
  %v22 = vld [vmem:[%s0 + $0x8] sm:$0xff]
  %v23 = vld [vmem:[%s0 + $0x10] sm:$0xff]
  %v24 = vld [vmem:[%s0 + $0x18] sm:$0xff]
  %v25 = vld [vmem:[%s0 + $0x20] sm:$0xff]
  %v26 = vld [vmem:[%s0 + $0x28] sm:$0xff]
  %v27 = vld [vmem:[%s0 + $0x30] sm:$0xff]
  %v28 = vld [vmem:[%s0 + $0x38] sm:$0xff]
  %v29 = vld [vmem:[%s0 + $0x40] sm:$0xff]
  %v30 = vld [vmem:[%s0 + $0x48] sm:$0xff]
  %v31 = vld [vmem:[%s0 + $0x50] sm:$0xff]
  %v32 = vld [vmem:[%s0 + $0x58] sm:$0xff]
  %v33 = vld [vmem:[%s0 + $0x60] sm:$0xff]
  %v34 = vld [vmem:[%s0 + $0x68] sm:$0xff]
  %v35 = vld [vmem:[%s0 + $0x70] sm:$0xff]
  %v36 = vld [vmem:[%s0 + $0x78] sm:$0xff]
  %v37 = vld [vmem:[%s0 + $0x80] sm:$0xff]
  %v38 = vld [vmem:[%s0 + $0x88] sm:$0xff]
  %v39 = vld [vmem:[%s0 + $0x90] sm:$0xff]
  %v40 = vld [vmem:[%s0 + $0x98] sm:$0xff]
  %v41 = vld [vmem:[%s0 + $0xa0] sm:$0xff]
  %v42 = vld [vmem:[%s0 + $0xa8] sm:$0xff]
  %v43 = vld [vmem:[%s0 + $0xb0] sm:$0xff]
  %v44 = vld [vmem:[%s0 + $0xb8] sm:$0xff]
  %v45 = vld [vmem:[%s0 + $0xc0] sm:$0xff]
  %v46 = vld [vmem:[%s0 + $0xc8] sm:$0xff]
  %v47 = vld [vmem:[%s0 + $0xd0] sm:$0xff]
  %v48 = vld [vmem:[%s0 + $0xd8] sm:$0xff]
  %v49 = vld [vmem:[%s0 + $0xe0] sm:$0xff]
  %v50 = vld [vmem:[%s0 + $0xe8] sm:$0xff]
  %v51 = vld [vmem:[%s0 + $0xf0] sm:$0xff]
  %v52 = vld [vmem:[%s0 + $0xf8] sm:$0xff]
  %v53 = vpack.c.bf16 %v22, %v21
  %v54 = vpack.c.bf16 %v24, %v23
  %v55 = vpack.c.bf16 %v26, %v25
  %v56 = vpack.c.bf16 %v28, %v27
  %v57 = vpack.c.bf16 %v30, %v29
  %v58 = vpack.c.bf16 %v32, %v31
  %v59 = vpack.c.bf16 %v34, %v33
  %v60 = vpack.c.bf16 %v36, %v35
  %v61 = vpack.c.bf16 %v38, %v37
  %v62 = vpack.c.bf16 %v40, %v39
  %v63 = vpack.c.bf16 %v42, %v41
  %v64 = vpack.c.bf16 %v44, %v43
  %v65 = vpack.c.bf16 %v46, %v45
  %v66 = vpack.c.bf16 %v48, %v47
  %v67 = vpack.c.bf16 %v50, %v49
  %v68 = vpack.c.bf16 %v52, %v51
  %v69 = vld [vmem:[%s1] sm:$0xff]
  %v70 = vld [vmem:[%s1 + $0x8] sm:$0xff]
  %v71 = vld [vmem:[%s2] sm:$0x3]
  %v73 = vperm.slane %v71, 0
  %v74 = vperm.slane %v71, 1
  %v79 = vunpack.c.l.b16 %v69
  %v80 = vunpack.c.h.b16 %v69
  %v81 = vunpack.c.l.b16 %v70
  %v82 = vunpack.c.h.b16 %v70
  %v83 = vpack.c.b16 %v81, %v79
  %v84 = vpack.c.b16 %v82, %v80
  %vm87 = vcmask 130048
  %v89 = vsel %vm87, %v53, 0
  %v92 = vsel %vm87, %v54, 0
  %v95 = vsel %vm87, %v55, 0
  %v98 = vsel %vm87, %v56, 0
  %v101 = vsel %vm87, %v57, 0
  %v104 = vsel %vm87, %v58, 0
  %v107 = vsel %vm87, %v59, 0
  %v110 = vsel %vm87, %v60, 0
  %v113 = vsel %vm87, %v61, 0
  %v116 = vsel %vm87, %v62, 0
  %v119 = vsel %vm87, %v63, 0
  %v122 = vsel %vm87, %v64, 0
  %v125 = vsel %vm87, %v65, 0
  %v128 = vsel %vm87, %v66, 0
  %v131 = vsel %vm87, %v67, 0
  %v134 = vsel %vm87, %v68, 0
  %136 = vmatpush.bf16.msra.mxu0 0
  %137 = vmatpush.bf16.msra.mxu0 0
  %138 = vmatpush.bf16.msra.mxu0 0
  %139 = vmatpush.bf16.msra.mxu0 0
  %140 = vmatpush.bf16.msra.mxu0 0
  %141 = vmatpush.bf16.msra.mxu0 0
  %142 = vmatpush.bf16.msra.mxu0 0
  %143 = vmatpush.bf16.msra.mxu0 %v83
  %144 = vmatmul.bf16.gmra.mxu0 %v89
  %v145 = vpop.f32.mrf.mxu0
  %v146 = vadd.f32 %v73, %v145
  %v147 = vpop.f32.mrf.mxu0
  %v148 = vadd.f32 %v73, %v147
  %149 = vmatmul.bf16.gmra.mxu0 %v92
  %v150 = vpop.f32.mrf.mxu0
  %v151 = vadd.f32 %v73, %v150
  %v152 = vpop.f32.mrf.mxu0
  %v153 = vadd.f32 %v73, %v152
  %154 = vmatmul.bf16.gmra.mxu0 %v95
  %v155 = vpop.f32.mrf.mxu0
  %v156 = vadd.f32 %v73, %v155
  %v157 = vpop.f32.mrf.mxu0
  %v158 = vadd.f32 %v73, %v157
  %159 = vmatmul.bf16.gmra.mxu0 %v98
  %v160 = vpop.f32.mrf.mxu0
  %v161 = vadd.f32 %v73, %v160
  %v162 = vpop.f32.mrf.mxu0
  %v163 = vadd.f32 %v73, %v162
  %164 = vmatmul.bf16.gmra.mxu0 %v101
  %v165 = vpop.f32.mrf.mxu0
  %v166 = vadd.f32 %v73, %v165
  %v167 = vpop.f32.mrf.mxu0
  %v168 = vadd.f32 %v73, %v167
  %169 = vmatmul.bf16.gmra.mxu0 %v104
  %v170 = vpop.f32.mrf.mxu0
  %v171 = vadd.f32 %v73, %v170
  %v172 = vpop.f32.mrf.mxu0
  %v173 = vadd.f32 %v73, %v172
  %174 = vmatmul.bf16.gmra.mxu0 %v107
  %v175 = vpop.f32.mrf.mxu0
  %v176 = vadd.f32 %v73, %v175
  %v177 = vpop.f32.mrf.mxu0
  %v178 = vadd.f32 %v73, %v177
  %179 = vmatmul.bf16.gmra.mxu0 %v110
  %v180 = vpop.f32.mrf.mxu0
  %v181 = vadd.f32 %v73, %v180
  %v182 = vpop.f32.mrf.mxu0
  %v183 = vadd.f32 %v73, %v182
  %184 = vmatmul.bf16.gmra.mxu0 %v113
  %v185 = vpop.f32.mrf.mxu0
  %v186 = vadd.f32 %v73, %v185
  %v187 = vpop.f32.mrf.mxu0
  %v188 = vadd.f32 %v73, %v187
  %189 = vmatmul.bf16.gmra.mxu0 %v116
  %v190 = vpop.f32.mrf.mxu0
  %v191 = vadd.f32 %v73, %v190
  %v192 = vpop.f32.mrf.mxu0
  %v193 = vadd.f32 %v73, %v192
  %194 = vmatmul.bf16.gmra.mxu0 %v119
  %v195 = vpop.f32.mrf.mxu0
  %v196 = vadd.f32 %v73, %v195
  %v197 = vpop.f32.mrf.mxu0
  %v198 = vadd.f32 %v73, %v197
  %199 = vmatmul.bf16.gmra.mxu0 %v122
  %v200 = vpop.f32.mrf.mxu0
  %v201 = vadd.f32 %v73, %v200
  %v202 = vpop.f32.mrf.mxu0
  %v203 = vadd.f32 %v73, %v202
  %204 = vmatmul.bf16.gmra.mxu0 %v125
  %v205 = vpop.f32.mrf.mxu0
  %v206 = vadd.f32 %v73, %v205
  %v207 = vpop.f32.mrf.mxu0
  %v208 = vadd.f32 %v73, %v207
  %209 = vmatmul.bf16.gmra.mxu0 %v128
  %v210 = vpop.f32.mrf.mxu0
  %v211 = vadd.f32 %v73, %v210
  %v212 = vpop.f32.mrf.mxu0
  %v213 = vadd.f32 %v73, %v212
  %214 = vmatmul.bf16.gmra.mxu0 %v131
  %v215 = vpop.f32.mrf.mxu0
  %v216 = vadd.f32 %v73, %v215
  %v217 = vpop.f32.mrf.mxu0
  %v218 = vadd.f32 %v73, %v217
  %219 = vmatmul.bf16.gmra.mxu0 %v134
  %v220 = vpop.f32.mrf.mxu0
  %v221 = vadd.f32 %v73, %v220
  %v222 = vpop.f32.mrf.mxu0
  %v223 = vadd.f32 %v73, %v222
  %224 = vdwg.mxu0
  %225 = vmatpush.bf16.msra.mxu0 0
  %226 = vmatpush.bf16.msra.mxu0 0
  %227 = vmatpush.bf16.msra.mxu0 0
  %228 = vmatpush.bf16.msra.mxu0 0
  %229 = vmatpush.bf16.msra.mxu0 0
  %230 = vmatpush.bf16.msra.mxu0 0
  %231 = vmatpush.bf16.msra.mxu0 0
  %232 = vmatpush.bf16.msra.mxu0 %v84
  %233 = vmatmul.bf16.gmra.mxu0 %v89
  %v234 = vpop.f32.mrf.mxu0
  %v235 = vadd.f32 %v74, %v234
  %v236 = vpop.f32.mrf.mxu0
  %v237 = vadd.f32 %v74, %v236
  %238 = vmatmul.bf16.gmra.mxu0 %v92
  %v239 = vpop.f32.mrf.mxu0
  %v240 = vadd.f32 %v74, %v239
  %v241 = vpop.f32.mrf.mxu0
  %v242 = vadd.f32 %v74, %v241
  %243 = vmatmul.bf16.gmra.mxu0 %v95
  %v244 = vpop.f32.mrf.mxu0
  %v245 = vadd.f32 %v74, %v244
  %v246 = vpop.f32.mrf.mxu0
  %v247 = vadd.f32 %v74, %v246
  %248 = vmatmul.bf16.gmra.mxu0 %v98
  %v249 = vpop.f32.mrf.mxu0
  %v250 = vadd.f32 %v74, %v249
  %v251 = vpop.f32.mrf.mxu0
  %v252 = vadd.f32 %v74, %v251
  %253 = vmatmul.bf16.gmra.mxu0 %v101
  %v254 = vpop.f32.mrf.mxu0
  %v255 = vadd.f32 %v74, %v254
  %v256 = vpop.f32.mrf.mxu0
  %v257 = vadd.f32 %v74, %v256
  %258 = vmatmul.bf16.gmra.mxu0 %v104
  %v259 = vpop.f32.mrf.mxu0
  %v260 = vadd.f32 %v74, %v259
  %v261 = vpop.f32.mrf.mxu0
  %v262 = vadd.f32 %v74, %v261
  %263 = vmatmul.bf16.gmra.mxu0 %v107
  %v264 = vpop.f32.mrf.mxu0
  %v265 = vadd.f32 %v74, %v264
  %v266 = vpop.f32.mrf.mxu0
  %v267 = vadd.f32 %v74, %v266
  %268 = vmatmul.bf16.gmra.mxu0 %v110
  %v269 = vpop.f32.mrf.mxu0
  %v270 = vadd.f32 %v74, %v269
  %v271 = vpop.f32.mrf.mxu0
  %v272 = vadd.f32 %v74, %v271
  %273 = vmatmul.bf16.gmra.mxu0 %v113
  %v274 = vpop.f32.mrf.mxu0
  %v275 = vadd.f32 %v74, %v274
  %v276 = vpop.f32.mrf.mxu0
  %v277 = vadd.f32 %v74, %v276
  %278 = vmatmul.bf16.gmra.mxu0 %v116
  %v279 = vpop.f32.mrf.mxu0
  %v280 = vadd.f32 %v74, %v279
  %v281 = vpop.f32.mrf.mxu0
  %v282 = vadd.f32 %v74, %v281
  %283 = vmatmul.bf16.gmra.mxu0 %v119
  %v284 = vpop.f32.mrf.mxu0
  %v285 = vadd.f32 %v74, %v284
  %v286 = vpop.f32.mrf.mxu0
  %v287 = vadd.f32 %v74, %v286
  %288 = vmatmul.bf16.gmra.mxu0 %v122
  %v289 = vpop.f32.mrf.mxu0
  %v290 = vadd.f32 %v74, %v289
  %v291 = vpop.f32.mrf.mxu0
  %v292 = vadd.f32 %v74, %v291
  %293 = vmatmul.bf16.gmra.mxu0 %v125
  %v294 = vpop.f32.mrf.mxu0
  %v295 = vadd.f32 %v74, %v294
  %v296 = vpop.f32.mrf.mxu0
  %v297 = vadd.f32 %v74, %v296
  %298 = vmatmul.bf16.gmra.mxu0 %v128
  %v299 = vpop.f32.mrf.mxu0
  %v300 = vadd.f32 %v74, %v299
  %v301 = vpop.f32.mrf.mxu0
  %v302 = vadd.f32 %v74, %v301
  %303 = vmatmul.bf16.gmra.mxu0 %v131
  %v304 = vpop.f32.mrf.mxu0
  %v305 = vadd.f32 %v74, %v304
  %v306 = vpop.f32.mrf.mxu0
  %v307 = vadd.f32 %v74, %v306
  %308 = vmatmul.bf16.gmra.mxu0 %v134
  %v309 = vpop.f32.mrf.mxu0
  %v310 = vadd.f32 %v74, %v309
  %v311 = vpop.f32.mrf.mxu0
  %v312 = vadd.f32 %v74, %v311
  %313 = vdwg.mxu0
  %v314 = vmax.f32 %v146, 0.0
  %v315 = vmax.f32 %v235, 0.0
  %v316 = vmax.f32 %v148, 0.0
  %v317 = vmax.f32 %v237, 0.0
  %v318 = vmax.f32 %v151, 0.0
  %v319 = vmax.f32 %v240, 0.0
  %v320 = vmax.f32 %v153, 0.0
  %v321 = vmax.f32 %v242, 0.0
  %v322 = vmax.f32 %v156, 0.0
  %v323 = vmax.f32 %v245, 0.0
  %v324 = vmax.f32 %v158, 0.0
  %v325 = vmax.f32 %v247, 0.0
  %v326 = vmax.f32 %v161, 0.0
  %v327 = vmax.f32 %v250, 0.0
  %v328 = vmax.f32 %v163, 0.0
  %v329 = vmax.f32 %v252, 0.0
  %v330 = vmax.f32 %v166, 0.0
  %v331 = vmax.f32 %v255, 0.0
  %v332 = vmax.f32 %v168, 0.0
  %v333 = vmax.f32 %v257, 0.0
  %v334 = vmax.f32 %v171, 0.0
  %v335 = vmax.f32 %v260, 0.0
  %v336 = vmax.f32 %v173, 0.0
  %v337 = vmax.f32 %v262, 0.0
  %v338 = vmax.f32 %v176, 0.0
  %v339 = vmax.f32 %v265, 0.0
  %v340 = vmax.f32 %v178, 0.0
  %v341 = vmax.f32 %v267, 0.0
  %v342 = vmax.f32 %v181, 0.0
  %v343 = vmax.f32 %v270, 0.0
  %v344 = vmax.f32 %v183, 0.0
  %v345 = vmax.f32 %v272, 0.0
  %v346 = vmax.f32 %v186, 0.0
  %v347 = vmax.f32 %v275, 0.0
  %v348 = vmax.f32 %v188, 0.0
  %v349 = vmax.f32 %v277, 0.0
  %v350 = vmax.f32 %v191, 0.0
  %v351 = vmax.f32 %v280, 0.0
  %v352 = vmax.f32 %v193, 0.0
  %v353 = vmax.f32 %v282, 0.0
  %v354 = vmax.f32 %v196, 0.0
  %v355 = vmax.f32 %v285, 0.0
  %v356 = vmax.f32 %v198, 0.0
  %v357 = vmax.f32 %v287, 0.0
  %v358 = vmax.f32 %v201, 0.0
  %v359 = vmax.f32 %v290, 0.0
  %v360 = vmax.f32 %v203, 0.0
  %v361 = vmax.f32 %v292, 0.0
  %v362 = vmax.f32 %v206, 0.0
  %v363 = vmax.f32 %v295, 0.0
  %v364 = vmax.f32 %v208, 0.0
  %v365 = vmax.f32 %v297, 0.0
  %v366 = vmax.f32 %v211, 0.0
  %v367 = vmax.f32 %v300, 0.0
  %v368 = vmax.f32 %v213, 0.0
  %v369 = vmax.f32 %v302, 0.0
  %v370 = vmax.f32 %v216, 0.0
  %v371 = vmax.f32 %v305, 0.0
  %v372 = vmax.f32 %v218, 0.0
  %v373 = vmax.f32 %v307, 0.0
  %v374 = vmax.f32 %v221, 0.0
  %v375 = vmax.f32 %v310, 0.0
  %v376 = vmax.f32 %v223, 0.0
  %v377 = vmax.f32 %v312, 0.0
  %v378 = vpack.c.bf16 %v316, %v314
  %v379 = vpack.c.bf16 %v317, %v315
  %v380 = vpack.c.bf16 %v320, %v318
  %v381 = vpack.c.bf16 %v321, %v319
  %v382 = vpack.c.bf16 %v324, %v322
  %v383 = vpack.c.bf16 %v325, %v323
  %v384 = vpack.c.bf16 %v328, %v326
  %v385 = vpack.c.bf16 %v329, %v327
  %v386 = vpack.c.bf16 %v332, %v330
  %v387 = vpack.c.bf16 %v333, %v331
  %v388 = vpack.c.bf16 %v336, %v334
  %v389 = vpack.c.bf16 %v337, %v335
  %v390 = vpack.c.bf16 %v340, %v338
  %v391 = vpack.c.bf16 %v341, %v339
  %v392 = vpack.c.bf16 %v344, %v342
  %v393 = vpack.c.bf16 %v345, %v343
  %v394 = vpack.c.bf16 %v348, %v346
  %v395 = vpack.c.bf16 %v349, %v347
  %v396 = vpack.c.bf16 %v352, %v350
  %v397 = vpack.c.bf16 %v353, %v351
  %v398 = vpack.c.bf16 %v356, %v354
  %v399 = vpack.c.bf16 %v357, %v355
  %v400 = vpack.c.bf16 %v360, %v358
  %v401 = vpack.c.bf16 %v361, %v359
  %v402 = vpack.c.bf16 %v364, %v362
  %v403 = vpack.c.bf16 %v365, %v363
  %v404 = vpack.c.bf16 %v368, %v366
  %v405 = vpack.c.bf16 %v369, %v367
  %v406 = vpack.c.bf16 %v372, %v370
  %v407 = vpack.c.bf16 %v373, %v371
  %v408 = vpack.c.bf16 %v376, %v374
  %v409 = vpack.c.bf16 %v377, %v375
  %v410 = vld [vmem:[%s3] sm:$0xf]
  %v411 = vld [vmem:[%s3 + $0x4] sm:$0xf]
  %v412 = vld [vmem:[%s3 + $0x8] sm:$0xf]
  %v413 = vld [vmem:[%s3 + $0xc] sm:$0xf]
  %v414 = vld [vmem:[%s3 + $0x10] sm:$0xf]
  %v415 = vld [vmem:[%s3 + $0x14] sm:$0xf]
  %v416 = vld [vmem:[%s3 + $0x18] sm:$0xf]
  %v417 = vld [vmem:[%s3 + $0x1c] sm:$0xf]
  %v418 = vld [vmem:[%s3 + $0x20] sm:$0xf]
  %v419 = vld [vmem:[%s3 + $0x24] sm:$0xf]
  %v420 = vld [vmem:[%s3 + $0x28] sm:$0xf]
  %v421 = vld [vmem:[%s3 + $0x2c] sm:$0xf]
  %v422 = vld [vmem:[%s3 + $0x30] sm:$0xf]
  %v423 = vld [vmem:[%s3 + $0x34] sm:$0xf]
  %v424 = vld [vmem:[%s3 + $0x38] sm:$0xf]
  %v425 = vld [vmem:[%s3 + $0x3c] sm:$0xf]
  %v426 = vld [vmem:[%s3 + $0x40] sm:$0xf]
  %v427 = vld [vmem:[%s3 + $0x44] sm:$0xf]
  %v428 = vld [vmem:[%s3 + $0x48] sm:$0xf]
  %v429 = vld [vmem:[%s3 + $0x4c] sm:$0xf]
  %v430 = vld [vmem:[%s3 + $0x50] sm:$0xf]
  %v431 = vld [vmem:[%s3 + $0x54] sm:$0xf]
  %v432 = vld [vmem:[%s3 + $0x58] sm:$0xf]
  %v433 = vld [vmem:[%s3 + $0x5c] sm:$0xf]
  %v434 = vld [vmem:[%s3 + $0x60] sm:$0xf]
  %v435 = vld [vmem:[%s3 + $0x64] sm:$0xf]
  %v436 = vld [vmem:[%s3 + $0x68] sm:$0xf]
  %v437 = vld [vmem:[%s3 + $0x6c] sm:$0xf]
  %v438 = vld [vmem:[%s3 + $0x70] sm:$0xf]
  %v439 = vld [vmem:[%s3 + $0x74] sm:$0xf]
  %v440 = vld [vmem:[%s3 + $0x78] sm:$0xf]
  %v441 = vld [vmem:[%s3 + $0x7c] sm:$0xf]
  %v442 = vld [vmem:[%s4] sm:$0x1]
  %v444 = vperm.slane %v442, 0
  %v478 = vunpack.c.l.b16 %v410
  %v479 = vunpack.c.l.b16 %v411
  %v480 = vunpack.c.l.b16 %v412
  %v481 = vunpack.c.l.b16 %v413
  %v482 = vunpack.c.l.b16 %v414
  %v483 = vunpack.c.l.b16 %v415
  %v484 = vunpack.c.l.b16 %v416
  %v485 = vunpack.c.l.b16 %v417
  %v486 = vunpack.c.l.b16 %v418
  %v487 = vunpack.c.l.b16 %v419
  %v488 = vunpack.c.l.b16 %v420
  %v489 = vunpack.c.l.b16 %v421
  %v490 = vunpack.c.l.b16 %v422
  %v491 = vunpack.c.l.b16 %v423
  %v492 = vunpack.c.l.b16 %v424
  %v493 = vunpack.c.l.b16 %v425
  %v494 = vunpack.c.l.b16 %v426
  %v495 = vunpack.c.l.b16 %v427
  %v496 = vunpack.c.l.b16 %v428
  %v497 = vunpack.c.l.b16 %v429
  %v498 = vunpack.c.l.b16 %v430
  %v499 = vunpack.c.l.b16 %v431
  %v500 = vunpack.c.l.b16 %v432
  %v501 = vunpack.c.l.b16 %v433
  %v502 = vunpack.c.l.b16 %v434
  %v503 = vunpack.c.l.b16 %v435
  %v504 = vunpack.c.l.b16 %v436
  %v505 = vunpack.c.l.b16 %v437
  %v506 = vunpack.c.l.b16 %v438
  %v507 = vunpack.c.l.b16 %v439
  %v508 = vunpack.c.l.b16 %v440
  %v509 = vunpack.c.l.b16 %v441
  %v510 = vpack.c.b16 %v479, %v478
  %v511 = vpack.c.b16 %v481, %v480
  %v512 = vpack.c.b16 %v483, %v482
  %v513 = vpack.c.b16 %v485, %v484
  %v514 = vpack.c.b16 %v487, %v486
  %v515 = vpack.c.b16 %v489, %v488
  %v516 = vpack.c.b16 %v491, %v490
  %v517 = vpack.c.b16 %v493, %v492
  %v518 = vpack.c.b16 %v495, %v494
  %v519 = vpack.c.b16 %v497, %v496
  %v520 = vpack.c.b16 %v499, %v498
  %v521 = vpack.c.b16 %v501, %v500
  %v522 = vpack.c.b16 %v503, %v502
  %v523 = vpack.c.b16 %v505, %v504
  %v524 = vpack.c.b16 %v507, %v506
  %v525 = vpack.c.b16 %v509, %v508
  %542 = vmatpush.bf16.msra.mxu0 %v517
  %543 = vmatpush.bf16.msra.mxu0 %v516
  %544 = vmatpush.bf16.msra.mxu0 %v515
  %545 = vmatpush.bf16.msra.mxu0 %v514
  %546 = vmatpush.bf16.msra.mxu0 %v513
  %547 = vmatpush.bf16.msra.mxu0 %v512
  %548 = vmatpush.bf16.msra.mxu0 %v511
  %549 = vmatpush.bf16.msra.mxu0 %v510
  %550 = vmatmul.bf16.gmra.mxu0 %v378
  %v551 = vpop.f32.mrf.mxu0
  %v552 = vadd.f32 %v444, %v551
  %v553 = vpop.f32.mrf.mxu0
  %v554 = vadd.f32 %v444, %v553
  %555 = vmatmul.bf16.gmra.mxu0 %v380
  %v556 = vpop.f32.mrf.mxu0
  %v557 = vadd.f32 %v444, %v556
  %v558 = vpop.f32.mrf.mxu0
  %v559 = vadd.f32 %v444, %v558
  %560 = vmatmul.bf16.gmra.mxu0 %v382
  %v561 = vpop.f32.mrf.mxu0
  %v562 = vadd.f32 %v444, %v561
  %v563 = vpop.f32.mrf.mxu0
  %v564 = vadd.f32 %v444, %v563
  %565 = vmatmul.bf16.gmra.mxu0 %v384
  %v566 = vpop.f32.mrf.mxu0
  %v567 = vadd.f32 %v444, %v566
  %v568 = vpop.f32.mrf.mxu0
  %v569 = vadd.f32 %v444, %v568
  %570 = vmatmul.bf16.gmra.mxu0 %v386
  %v571 = vpop.f32.mrf.mxu0
  %v572 = vadd.f32 %v444, %v571
  %v573 = vpop.f32.mrf.mxu0
  %v574 = vadd.f32 %v444, %v573
  %575 = vmatmul.bf16.gmra.mxu0 %v388
  %v576 = vpop.f32.mrf.mxu0
  %v577 = vadd.f32 %v444, %v576
  %v578 = vpop.f32.mrf.mxu0
  %v579 = vadd.f32 %v444, %v578
  %580 = vmatmul.bf16.gmra.mxu0 %v390
  %v581 = vpop.f32.mrf.mxu0
  %v582 = vadd.f32 %v444, %v581
  %v583 = vpop.f32.mrf.mxu0
  %v584 = vadd.f32 %v444, %v583
  %585 = vmatmul.bf16.gmra.mxu0 %v392
  %v586 = vpop.f32.mrf.mxu0
  %v587 = vadd.f32 %v444, %v586
  %v588 = vpop.f32.mrf.mxu0
  %v589 = vadd.f32 %v444, %v588
  %590 = vmatmul.bf16.gmra.mxu0 %v394
  %v591 = vpop.f32.mrf.mxu0
  %v592 = vadd.f32 %v444, %v591
  %v593 = vpop.f32.mrf.mxu0
  %v594 = vadd.f32 %v444, %v593
  %595 = vmatmul.bf16.gmra.mxu0 %v396
  %v596 = vpop.f32.mrf.mxu0
  %v597 = vadd.f32 %v444, %v596
  %v598 = vpop.f32.mrf.mxu0
  %v599 = vadd.f32 %v444, %v598
  %600 = vmatmul.bf16.gmra.mxu0 %v398
  %v601 = vpop.f32.mrf.mxu0
  %v602 = vadd.f32 %v444, %v601
  %v603 = vpop.f32.mrf.mxu0
  %v604 = vadd.f32 %v444, %v603
  %605 = vmatmul.bf16.gmra.mxu0 %v400
  %v606 = vpop.f32.mrf.mxu0
  %v607 = vadd.f32 %v444, %v606
  %v608 = vpop.f32.mrf.mxu0
  %v609 = vadd.f32 %v444, %v608
  %610 = vmatmul.bf16.gmra.mxu0 %v402
  %v611 = vpop.f32.mrf.mxu0
  %v612 = vadd.f32 %v444, %v611
  %v613 = vpop.f32.mrf.mxu0
  %v614 = vadd.f32 %v444, %v613
  %615 = vmatmul.bf16.gmra.mxu0 %v404
  %v616 = vpop.f32.mrf.mxu0
  %v617 = vadd.f32 %v444, %v616
  %v618 = vpop.f32.mrf.mxu0
  %v619 = vadd.f32 %v444, %v618
  %620 = vmatmul.bf16.gmra.mxu0 %v406
  %v621 = vpop.f32.mrf.mxu0
  %v622 = vadd.f32 %v444, %v621
  %v623 = vpop.f32.mrf.mxu0
  %v624 = vadd.f32 %v444, %v623
  %625 = vmatmul.bf16.gmra.mxu0 %v408
  %v626 = vpop.f32.mrf.mxu0
  %v627 = vadd.f32 %v444, %v626
  %v628 = vpop.f32.mrf.mxu0
  %v629 = vadd.f32 %v444, %v628
  %630 = vdwg.mxu0
  %631 = vmatpush.bf16.msra.mxu0 %v525
  %632 = vmatpush.bf16.msra.mxu0 %v524
  %633 = vmatpush.bf16.msra.mxu0 %v523
  %634 = vmatpush.bf16.msra.mxu0 %v522
  %635 = vmatpush.bf16.msra.mxu0 %v521
  %636 = vmatpush.bf16.msra.mxu0 %v520
  %637 = vmatpush.bf16.msra.mxu0 %v519
  %638 = vmatpush.bf16.msra.mxu0 %v518
  %639 = vmatmul.bf16.gmra.mxu0 %v379
  %v640 = vpop.f32.mrf.mxu0
  %v641 = vadd.f32 %v552, %v640
  %v642 = vpop.f32.mrf.mxu0
  %v643 = vadd.f32 %v554, %v642
  %644 = vmatmul.bf16.gmra.mxu0 %v381
  %v645 = vpop.f32.mrf.mxu0
  %v646 = vadd.f32 %v557, %v645
  %v647 = vpop.f32.mrf.mxu0
  %v648 = vadd.f32 %v559, %v647
  %649 = vmatmul.bf16.gmra.mxu0 %v383
  %v650 = vpop.f32.mrf.mxu0
  %v651 = vadd.f32 %v562, %v650
  %v652 = vpop.f32.mrf.mxu0
  %v653 = vadd.f32 %v564, %v652
  %654 = vmatmul.bf16.gmra.mxu0 %v385
  %v655 = vpop.f32.mrf.mxu0
  %v656 = vadd.f32 %v567, %v655
  %v657 = vpop.f32.mrf.mxu0
  %v658 = vadd.f32 %v569, %v657
  %659 = vmatmul.bf16.gmra.mxu0 %v387
  %v660 = vpop.f32.mrf.mxu0
  %v661 = vadd.f32 %v572, %v660
  %v662 = vpop.f32.mrf.mxu0
  %v663 = vadd.f32 %v574, %v662
  %664 = vmatmul.bf16.gmra.mxu0 %v389
  %v665 = vpop.f32.mrf.mxu0
  %v666 = vadd.f32 %v577, %v665
  %v667 = vpop.f32.mrf.mxu0
  %v668 = vadd.f32 %v579, %v667
  %669 = vmatmul.bf16.gmra.mxu0 %v391
  %v670 = vpop.f32.mrf.mxu0
  %v671 = vadd.f32 %v582, %v670
  %v672 = vpop.f32.mrf.mxu0
  %v673 = vadd.f32 %v584, %v672
  %674 = vmatmul.bf16.gmra.mxu0 %v393
  %v675 = vpop.f32.mrf.mxu0
  %v676 = vadd.f32 %v587, %v675
  %v677 = vpop.f32.mrf.mxu0
  %v678 = vadd.f32 %v589, %v677
  %679 = vmatmul.bf16.gmra.mxu0 %v395
  %v680 = vpop.f32.mrf.mxu0
  %v681 = vadd.f32 %v592, %v680
  %v682 = vpop.f32.mrf.mxu0
  %v683 = vadd.f32 %v594, %v682
  %684 = vmatmul.bf16.gmra.mxu0 %v397
  %v685 = vpop.f32.mrf.mxu0
  %v686 = vadd.f32 %v597, %v685
  %v687 = vpop.f32.mrf.mxu0
  %v688 = vadd.f32 %v599, %v687
  %689 = vmatmul.bf16.gmra.mxu0 %v399
  %v690 = vpop.f32.mrf.mxu0
  %v691 = vadd.f32 %v602, %v690
  %v692 = vpop.f32.mrf.mxu0
  %v693 = vadd.f32 %v604, %v692
  %694 = vmatmul.bf16.gmra.mxu0 %v401
  %v695 = vpop.f32.mrf.mxu0
  %v696 = vadd.f32 %v607, %v695
  %v697 = vpop.f32.mrf.mxu0
  %v698 = vadd.f32 %v609, %v697
  %699 = vmatmul.bf16.gmra.mxu0 %v403
  %v700 = vpop.f32.mrf.mxu0
  %v701 = vadd.f32 %v612, %v700
  %v702 = vpop.f32.mrf.mxu0
  %v703 = vadd.f32 %v614, %v702
  %704 = vmatmul.bf16.gmra.mxu0 %v405
  %v705 = vpop.f32.mrf.mxu0
  %v706 = vadd.f32 %v617, %v705
  %v707 = vpop.f32.mrf.mxu0
  %v708 = vadd.f32 %v619, %v707
  %709 = vmatmul.bf16.gmra.mxu0 %v407
  %v710 = vpop.f32.mrf.mxu0
  %v711 = vadd.f32 %v622, %v710
  %v712 = vpop.f32.mrf.mxu0
  %v713 = vadd.f32 %v624, %v712
  %714 = vmatmul.bf16.gmra.mxu0 %v409
  %v715 = vpop.f32.mrf.mxu0
  %v716 = vadd.f32 %v627, %v715
  %v717 = vpop.f32.mrf.mxu0
  %v718 = vadd.f32 %v629, %v717
  %719 = vdwg.mxu0
  %720 = vst [vmem:[%s5] sm:$0xff] %v641
  %721 = vst [vmem:[%s5 + $0x8] sm:$0xff] %v643
  %722 = vst [vmem:[%s5 + $0x10] sm:$0xff] %v646
  %723 = vst [vmem:[%s5 + $0x18] sm:$0xff] %v648
  %724 = vst [vmem:[%s5 + $0x20] sm:$0xff] %v651
  %725 = vst [vmem:[%s5 + $0x28] sm:$0xff] %v653
  %726 = vst [vmem:[%s5 + $0x30] sm:$0xff] %v656
  %727 = vst [vmem:[%s5 + $0x38] sm:$0xff] %v658
  %728 = vst [vmem:[%s5 + $0x40] sm:$0xff] %v661
  %729 = vst [vmem:[%s5 + $0x48] sm:$0xff] %v663
  %730 = vst [vmem:[%s5 + $0x50] sm:$0xff] %v666
  %731 = vst [vmem:[%s5 + $0x58] sm:$0xff] %v668
  %732 = vst [vmem:[%s5 + $0x60] sm:$0xff] %v671
  %733 = vst [vmem:[%s5 + $0x68] sm:$0xff] %v673
  %734 = vst [vmem:[%s5 + $0x70] sm:$0xff] %v676
  %735 = vst [vmem:[%s5 + $0x78] sm:$0xff] %v678
  %736 = vst [vmem:[%s5 + $0x80] sm:$0xff] %v681
  %737 = vst [vmem:[%s5 + $0x88] sm:$0xff] %v683
  %738 = vst [vmem:[%s5 + $0x90] sm:$0xff] %v686
  %739 = vst [vmem:[%s5 + $0x98] sm:$0xff] %v688
  %740 = vst [vmem:[%s5 + $0xa0] sm:$0xff] %v691
  %741 = vst [vmem:[%s5 + $0xa8] sm:$0xff] %v693
  %742 = vst [vmem:[%s5 + $0xb0] sm:$0xff] %v696
  %743 = vst [vmem:[%s5 + $0xb8] sm:$0xff] %v698
  %744 = vst [vmem:[%s5 + $0xc0] sm:$0xff] %v701
  %745 = vst [vmem:[%s5 + $0xc8] sm:$0xff] %v703
  %746 = vst [vmem:[%s5 + $0xd0] sm:$0xff] %v706
  %747 = vst [vmem:[%s5 + $0xd8] sm:$0xff] %v708
  %748 = vst [vmem:[%s5 + $0xe0] sm:$0xff] %v711
  %749 = vst [vmem:[%s5 + $0xe8] sm:$0xff] %v713
  %750 = vst [vmem:[%s5 + $0xf0] sm:$0xff] %v716
  %751 = vst [vmem:[%s5 + $0xf8] sm:$0xff] %v718
  // Predicated region
  $region22: #{dqn_her_forward.1} parent=0 // pred_check
    _
  $region23: #{dqn_her_forward.1} parent=0 // pred_check_branch
    %753 = sbr.rel (0) target = $region25
  $region24: #{dqn_her_forward.1} parent=0 // pred_region
    _
  $region25: #{dqn_her_forward.1} parent=0 // pred_fallthru
    _
  // Predicated region
  $region26: #{dqn_her_forward.1} parent=0 // pred_check
    _
  $region27: #{dqn_her_forward.1} parent=0 // pred_check_branch
    %755 = sbr.rel (0) target = $region29
  $region28: #{dqn_her_forward.1} parent=0 // pred_region
    _
  $region29: #{dqn_her_forward.1} parent=0 // pred_fallthru
    _

</llo_original>
